<compile_context>
chip_gen: v6e
topology: v6e:2x2x1
jax: 0.10.0
libtpu: 0.0.40
codegen_flags: <defaults>
</compile_context>

<pallas_src>
import functools

import jax
import jax.numpy as jnp
from jax.experimental import pallas as pl
from jax.experimental.pallas import tpu as pltpu


# Cap on the row-block size: keeps the 128-lane-padded (rows, 1) output / accumulator
# buffers to ~1-2 MiB each instead of letting them eat VMEM meant for input tiles.
_MAX_BLOCK_ROWS = 4096


def _round_up(x, m):
    return ((x + m - 1) // m) * m


def _round_down(x, m):
    return (x // m) * m


def _sublane_pack(dtype):
    # Sublane packing: 8 rows/vreg for 4-byte dtypes, 16 for bf16/fp16, 32 for int8.
    return max(8, 32 // jnp.dtype(dtype).itemsize)


def _default_target_tile_bytes():
    """Per-input-buffer VMEM budget (before 2x double buffering), per TPU generation."""
    try:
        kind = jax.devices()[0].device_kind.lower()
    except Exception:
        kind = ""
    if "v7" in kind:
        # v7x: ~3.2 TB/s HBM but only 64 MiB VMEM/TC. Bigger tiles amortize the
        # ~0.35us per-grid-step cost; 2 x 14 MiB double-buffered still leaves headroom.
        return 14 * 1024 * 1024
    if "v6" in kind:
        # v6e: ~1.4 TB/s HBM, 128 MiB VMEM -> ~10 MiB tiles cut step overhead to ~3-4%.
        return 10 * 1024 * 1024
    # v5e / unknown: ~0.8 TB/s HBM, per-step DMA ~8us so 6 MiB tiles already give
    # <5% step overhead and stay friendly to the tighter scoped-VMEM defaults.
    return 6 * 1024 * 1024


def _gap_single_kernel(x_ref, o_ref, *, inv_hw):
    # Whole spatial extent in one tile: lane-axis reduce in f32, scale by 1/hw.
    s = jnp.sum(x_ref[...], axis=1, keepdims=True, dtype=jnp.float32)
    o_ref[...] = (s * inv_hw).astype(o_ref.dtype)


def _gap_multi_kernel(x_ref, o_ref, acc_ref, *, hw, block_hw, inv_hw):
    # Grid: (row_blocks [parallel], hw_blocks [arbitrary, reduction axis last]).
    j = pl.program_id(1)
    nj = pl.num_programs(1)

    @pl.when(j == 0)
    def _():
        acc_ref[...] = jnp.zeros_like(acc_ref)

    if hw % block_hw == 0:
        acc_ref[...] += jnp.sum(x_ref[...], axis=1, keepdims=True, dtype=jnp.float32)
    else:
        # Non-tail blocks: plain reduce, no iota/compare/select on the critical path.
        @pl.when(j < nj - 1)
        def _():
            acc_ref[...] += jnp.sum(
                x_ref[...], axis=1, keepdims=True, dtype=jnp.float32
            )

        # Tail block only: lanes past hw hold undefined pad data -> mask them out.
        @pl.when(j == nj - 1)
        def _():
            x = x_ref[...]
            lane = jax.lax.broadcasted_iota(jnp.int32, x.shape, 1) + j * block_hw
            x = jnp.where(lane < hw, x, jnp.zeros_like(x))
            acc_ref[...] += jnp.sum(x, axis=1, keepdims=True, dtype=jnp.float32)

    @pl.when(j == nj - 1)
    def _():
        # Multiply by the compile-time constant 1/hw instead of dividing.
        o_ref[...] = (acc_ref[...] * inv_hw).astype(o_ref.dtype)


def global_avg_pool2d(x, *, target_tile_bytes=None):
    """x: [N, C, H, W] -> [N, C, 1, 1], mean over (H, W)."""
    N, C, H, W = x.shape
    rows = N * C
    hw = H * W
    itemsize = jnp.dtype(x.dtype).itemsize
    pack = _sublane_pack(x.dtype)
    if target_tile_bytes is None:
        target_tile_bytes = _default_target_tile_bytes()

    x2d = x.reshape(rows, hw)
    inv_hw = 1.0 / float(hw)

    # Padded lane footprint of one row in VMEM (last dim rounds up to 128 lanes).
    hw_pad = _round_up(hw, 128)
    single_step = hw <= 128 or pack * hw_pad * itemsize <= target_tile_bytes

    # --- tile sizing (VMEM-budget driven, padded footprints) ---
    if single_step:
        block_hw = hw
        block_hw_pad = hw_pad
    else:
        block_hw = max(128, _round_down(target_tile_bytes // (pack * itemsize), 128))
        block_hw = min(block_hw, _round_down(hw, 128))
        block_hw_pad = block_hw  # already a multiple of 128

    block_rows = max(
        pack, _round_down(target_tile_bytes // (block_hw_pad * itemsize), pack)
    )
    block_rows = min(block_rows, _MAX_BLOCK_ROWS)
    block_rows = min(block_rows, _round_up(rows, pack))
    # NOTE: when rows % block_rows != 0, the padded rows of the last row block carry
    # undefined data.  That is benign here because those rows never map to valid
    # output and there is no cross-row reduction -- keep it that way on refactors.

    row_blocks = pl.cdiv(rows, block_rows)

    # --- VMEM accounting with *padded* footprints ---
    # input tile: block_rows x round_up(block_hw, 128), double-buffered.
    in_tile_bytes = block_rows * block_hw_pad * itemsize
    # (block_rows, 1) output pads to 128 lanes; double-buffered.
    out_tile_bytes = block_rows * 128 * itemsize
    # f32 accumulator scratch (multi-step only), also 128-lane padded.
    acc_bytes = 0 if single_step else block_rows * 128 * 4
    vmem_limit = int(2 * in_tile_bytes + 2 * out_tile_bytes + acc_bytes + (2 << 20))
    vmem_limit = max(vmem_limit, 16 * 1024 * 1024)
    vmem_limit = min(vmem_limit, 64 * 1024 * 1024)  # stay within v7x physical VMEM

    # TODO(synk): for shapes with tiny N*C and huge H*W (row_blocks == 1) the
    #   reduction axis is "arbitrary", so one v7x TensorCore idles; split the hw
    #   reduction across the parallel axis (per-core partial sums + trivial combine).
    # TODO(synk): for hw < 128 the per-row HBM->VMEM copy degenerates to sub-512B
    #   scatters; a lane-dense (rows*hw/L, L) view reduced via an MXU segment-matmul
    #   would restore full-width DMA if profiling shows a descriptor-bound copy.
    # TODO(synk): a lane-dense (1, block_rows) output layout would replace masked
    #   vst.msk stores; skipped since output traffic is negligible vs. input reads.

    if single_step:
        out2d = pl.pallas_call(
            functools.partial(_gap_single_kernel, inv_hw=inv_hw),
            out_shape=jax.ShapeDtypeStruct((rows, 1), x.dtype),
            grid_spec=pltpu.PrefetchScalarGridSpec(
                num_scalar_prefetch=0,
                grid=(row_blocks,),
                in_specs=[pl.BlockSpec((block_rows, block_hw), lambda i: (i, 0))],
                out_specs=pl.BlockSpec((block_rows, 1), lambda i: (i, 0)),
            ),
            compiler_params=pltpu.CompilerParams(
                dimension_semantics=("parallel",),
                vmem_limit_bytes=vmem_limit,
            ),
        )(x2d)
    else:
        hw_blocks = pl.cdiv(hw, block_hw)
        out2d = pl.pallas_call(
            functools.partial(
                _gap_multi_kernel, hw=hw, block_hw=block_hw, inv_hw=inv_hw
            ),
            out_shape=jax.ShapeDtypeStruct((rows, 1), x.dtype),
            grid_spec=pltpu.PrefetchScalarGridSpec(
                num_scalar_prefetch=0,
                grid=(row_blocks, hw_blocks),
                in_specs=[pl.BlockSpec((block_rows, block_hw), lambda i, j: (i, j))],
                out_specs=pl.BlockSpec((block_rows, 1), lambda i, j: (i, 0)),
                scratch_shapes=[pltpu.VMEM((block_rows, 1), jnp.float32)],
            ),
            compiler_params=pltpu.CompilerParams(
                dimension_semantics=("parallel", "arbitrary"),
                vmem_limit_bytes=vmem_limit,
            ),
        )(x2d)

    return out2d.reshape(N, C, 1, 1)


if __name__ == "__main__":
    k1, k2 = jax.random.split(jax.random.PRNGKey(0))

    # Primary check: shape per the module spec (exercises the single-step fast path).
    N, C, H, W = 2, 4, 16, 16
    x = jax.random.normal(k1, (N, C, H, W), dtype=jnp.float32)
    out = jax.block_until_ready(global_avg_pool2d(x))
    ref = jnp.mean(x, axis=(2, 3), keepdims=True)
    assert out.shape == (N, C, 1, 1), out.shape
    assert jnp.allclose(out, ref, atol=1e-5, rtol=1e-5)

    # Secondary check: tiny tile budget forces the multi-step path, including a
    # partial tail block on the hw axis and a partially-padded row block.
    x2 = jax.random.normal(k2, (1, 3, 20, 20), dtype=jnp.float32)
    out2 = jax.block_until_ready(global_avg_pool2d(x2, target_tile_bytes=8 * 1024))
    ref2 = jnp.mean(x2, axis=(2, 3), keepdims=True)
    assert out2.shape == (1, 3, 1, 1), out2.shape
    assert jnp.allclose(out2, ref2, atol=1e-5, rtol=1e-5)

    print("KERNEL_OK")
</pallas_src>

<mosaic_0001>
module attributes {stable_mosaic.version = 11 : i64} {
  func.func @_gap_single_kernel(%arg0: i32, %arg1: memref<8x256xf32, #tpu.memory_space<vmem>>, %arg2: memref<8x1xf32, #tpu.memory_space<vmem>>) attributes {dimension_semantics = [#tpu.dimension_semantics<parallel>], iteration_bounds = array<i64: 1>, scalar_prefetch = 0 : i64, scratch_operands = 0 : i64, tpu.core_type = #tpu.core_type<tc>, window_params = [{transform_indices = @transform_0, window_bounds = array<i64: 8, 256>}, {transform_indices = @transform_1, window_bounds = array<i64: 8, 1>}]} {
    %c0 = arith.constant 0 : index
    %c0_0 = arith.constant 0 : index
    %0 = vector.load %arg1[%c0, %c0_0] : memref<8x256xf32, #tpu.memory_space<vmem>>, vector<8x256xf32>
    %cst = arith.constant dense<0.000000e+00> : vector<8xf32>
    %1 = vector.multi_reduction <add>, %0, %cst [1] : vector<8x256xf32> to vector<8xf32>
    %2 = vector.shape_cast %1 : vector<8xf32> to vector<8x1xf32>
    %cst_1 = arith.constant 3.906250e-03 : f32
    %3 = vector.broadcast %cst_1 : f32 to vector<8x1xf32>
    %4 = arith.mulf %2, %3 : vector<8x1xf32>
    %c0_2 = arith.constant 0 : index
    %c0_3 = arith.constant 0 : index
    %5 = vector.load %arg2[%c0_2, %c0_3] : memref<8x1xf32, #tpu.memory_space<vmem>>, vector<8x1xf32>
    tpu.vector_store %arg2[%c0_2, %c0_3], %4 {strides = array<i32>} : memref<8x1xf32, #tpu.memory_space<vmem>>, vector<8x1xf32>,
    return
  }
  func.func @transform_0(%arg0: i32) -> (i32, i32) {
    %c0_i32 = arith.constant 0 : i32
    %c0_i32_0 = arith.constant 0 : i32
    return %arg0, %c0_i32 : i32, i32
  }
  func.func @transform_1(%arg0: i32) -> (i32, i32) {
    %c0_i32 = arith.constant 0 : i32
    %c0_i32_0 = arith.constant 0 : i32
    return %arg0, %c0_i32 : i32, i32
  }
}

</mosaic_0001>

<llo_original>
// kernel: tpu_custom_call.1
$region0: #{tpu_custom_call.1}
  #allocation0 [shape = 'u32[]', space=smem, size = 0x4, offset = 0x4, fixed_abs, tag = 'smem constant byte address 0x4 - core index']
  #allocation1 [shape = 'u32[144,128]{1,0:T(1,128)}', space=vmem, size = 0x12000, scoped, tag = 'internal scratch']
  %s0 = inlined_call_operand.hbm [shape: f32[8,256], index: 0, kind: input, shape index: {}]
  %s1 = inlined_call_operand.vmem [shape: f32[8,1], index: 1, kind: output, shape index: {}]
  %s2 = sld [smem:[#allocation0]]
  $region18: #{tpu_custom_call.1} parent=0
    _
  %s4 = ssub.s32 1, %s2
  %s5 = scalar_select 0, %s4, %s2
  $region1: #{tpu_custom_call.1} parent=0
    #allocation2 [shape = 'u8[8192]{0}', space=vmem, size = 0x2000, scoped, tag = 'input window, operand 0, single buffered']
    #allocation3 [shape = 's32[1]{0}', space=sflag, size = 0x4, scoped, tag = 'scoped memory for tpu_custom_call.1']
    %6 = vsyncpa [#allocation3], 0
    // Predicated region
    $region2: #{tpu_custom_call.1} parent=1 // pred_check
      _
    $region3: #{tpu_custom_call.1} parent=1 // pred_check_branch
      %8 = sbr.rel (0) target = $region5
    $region4: #{tpu_custom_call.1} parent=1 // pred_region
      %s10 = ssub.s32 256, 256
      %11 = vsyncadd [#allocation3], %s10
      %s13 = sshll.u32 [#allocation2], 4
      %s14 = int_to_ptr.vmem [resolvable:$true] %s13
      %16 = dma.hbm_to_vmem [thread:$0]  %s0, 256, %s14, [#allocation3]
    $region5: #{tpu_custom_call.1} parent=1 // pred_fallthru
      _
    // Predicated region
    $region6: #{tpu_custom_call.1} parent=1 // pred_check
      _
    $region7: #{tpu_custom_call.1} parent=1 // pred_check_branch
      %18 = sbr.rel (0) target = $region9
    $region8: #{tpu_custom_call.1} parent=1 // pred_region
      %19 = dma.done [#allocation3], 256
    $region9: #{tpu_custom_call.1} parent=1 // pred_fallthru
      _
    %v20 = vld [vmem:[#allocation2] sm:$0xff]
    %v21 = vld [vmem:[#allocation2 + $0x8] sm:$0xff]
    %v22 = vadd.f32 %v20, %v21
    %23 = vadd.xlane.f32.xlu0 %v22
    %v24 = vpop.xlane.xlu0 %23
    %v25 = vmul.f32 %v24, 0.00390625
    %vm26 = vcmask 7168
    %27 = vst.msk [vmem:[%s1] sm:$0xff] %vm26, %v25
    // Predicated region
    $region10: #{tpu_custom_call.1} parent=1 // pred_check
      _
    $region11: #{tpu_custom_call.1} parent=1 // pred_check_branch
      %29 = sbr.rel (0) target = $region13
    $region12: #{tpu_custom_call.1} parent=1 // pred_region
      _
    $region13: #{tpu_custom_call.1} parent=1 // pred_fallthru
      _
    // Predicated region
    $region14: #{tpu_custom_call.1} parent=1 // pred_check
      _
    $region15: #{tpu_custom_call.1} parent=1 // pred_check_branch
      %31 = sbr.rel (0) target = $region17
    $region16: #{tpu_custom_call.1} parent=1 // pred_region
      _
    $region17: #{tpu_custom_call.1} parent=1 // pred_fallthru
      _
    %32 = vsyncpa [#allocation3], 1

</llo_original>
